<compile_context>
chip_gen: v6e
topology: v6e:2x2x1
jax: 0.10.0
libtpu: 0.0.40
codegen_flags: <defaults>
</compile_context>

<pallas_src>
import numpy as np
import jax
import jax.numpy as jnp
from jax.experimental import pallas as pl
from jax.experimental.pallas import tpu as pltpu

KS = 3  # kernel_size of the SelfSimilar module


def _lane_block(hw):
    """Largest lane tile (multiple of 128, <= 512) dividing hw with >= 2 grid steps."""
    if hw % 128 != 0:
        return hw
    for cand in (512, 256, 128):
        if hw % cand == 0 and hw // cand >= 2:
            return cand
    return hw


def _make_kernel(kk, c2, use_mxu):
    """Fused pixelwise-conv + channel-mix (1x1 conv) kernel body."""

    def kernel(xt_ref, w1_ref, wc_ref, b_ref, o_ref):
        # xt_ref: (kk, 2c, BL)  pre-shifted taps, lane-dense
        # w1_ref: (kk, 1, BL)   per-pixel spatially varying tap weights
        # wc_ref: (2c, 2c)      block-diagonal 1x1-conv weight (both components)
        # b_ref : (2c, 1)       bias column
        # o_ref : (2c, BL)
        acc = xt_ref[0] * w1_ref[0]                       # (2c, BL)
        for t in range(1, kk):
            acc = acc + xt_ref[t] * w1_ref[t]             # dense aligned FMAs

        wc = wc_ref[...]                                  # (2c, 2c), tiny
        b = b_ref[...]                                    # (2c, 1)
        if use_mxu:
            mix = jnp.dot(wc, acc, preferred_element_type=jnp.float32)
        else:
            # Small channel count: 2c broadcast FMAs on the VPU, skip the MXU.
            mix = wc[:, 0:1] * acc[0:1, :]                # (2c,1)*(1,BL) -> (2c,BL)
            for i in range(1, c2):
                mix = mix + wc[:, i:i + 1] * acc[i:i + 1, :]
        o_ref[...] = (mix + b).astype(o_ref.dtype)

    return kernel


def self_similar_forward(x, weight1, conv_w, conv_b, kernel_size=KS):
    """x: (c, h, w, 2) -> (c, h, w, 2), matching SelfSimilar.forward (get_Gx)."""
    c, h, w, two = x.shape
    assert two == 2
    k = kernel_size
    p = k // 2
    kk = k * k
    hw = h * w
    c2 = 2 * c

    # ---- layout plumbing in plain JAX (outside the kernel hot path) ----
    # (c,h,w,2) -> (2,c,h,w) -> (2c, h, w), zero-pad, build the k^2 shifted
    # taps flattened to a lane-dense (2c, h*w) slab each.
    xn = jnp.transpose(x, (3, 0, 1, 2)).astype(jnp.float32).reshape(c2, h, w)
    xp = jnp.pad(xn, ((0, 0), (p, p), (p, p)))
    taps = jnp.stack(
        [xp[:, kh:kh + h, kw:kw + w].reshape(c2, hw)
         for kh in range(k) for kw in range(k)],
        axis=0)                                                  # (kk, 2c, hw)

    w1 = weight1.reshape(kk, 1, hw).astype(jnp.float32)          # (kk, 1, hw)
    wc = conv_w.reshape(c, c).astype(jnp.float32)
    wc2 = jnp.kron(jnp.eye(2, dtype=jnp.float32), wc)            # (2c, 2c) block-diag
    b2 = jnp.tile(conv_b.astype(jnp.float32), 2).reshape(c2, 1)  # (2c, 1)

    bl = _lane_block(hw)
    grid = (hw // bl,)
    use_mxu = c2 > 16  # small c: VPU FMA epilogue; large c: MXU matmul

    out = pl.pallas_call(
        _make_kernel(kk, c2, use_mxu),
        out_shape=jax.ShapeDtypeStruct((c2, hw), jnp.float32),
        grid=grid,
        in_specs=[
            pl.BlockSpec((kk, c2, bl), lambda j: (0, 0, j)),
            pl.BlockSpec((kk, 1, bl), lambda j: (0, 0, j)),
            pl.BlockSpec((c2, c2), lambda j: (0, 0)),
            pl.BlockSpec((c2, 1), lambda j: (0, 0)),
        ],
        out_specs=pl.BlockSpec((c2, bl), lambda j: (0, j)),
        compiler_params=pltpu.CompilerParams(
            dimension_semantics=("parallel",),
            vmem_limit_bytes=32 * 1024 * 1024),
    )(taps, w1, wc2, b2)

    # (2c, hw) -> (2, c, h, w) -> (c, h, w, 2)
    return jnp.transpose(out.reshape(2, c, h, w), (1, 2, 3, 0))


def _reference_forward(x, weight1, conv_w, conv_b, k=KS):
    """Pure-JAX reference mirroring the PyTorch module."""
    c, h, w, _ = x.shape
    p = k // 2
    xn = jnp.transpose(x, (3, 0, 1, 2)).astype(jnp.float32)
    xp = jnp.pad(xn, ((0, 0), (0, 0), (p, p), (p, p)))
    w1 = weight1.reshape(k * k, h, w).astype(jnp.float32)
    acc = jnp.zeros_like(xn)
    for kh in range(k):
        for kw in range(k):
            acc = acc + xp[:, :, kh:kh + h, kw:kw + w] * w1[kh * k + kw]
    out = jnp.einsum("oc,ncij->noij",
                     conv_w.reshape(c, c).astype(jnp.float32), acc)
    out = out + conv_b.reshape(1, c, 1, 1).astype(jnp.float32)
    return jnp.transpose(out, (1, 2, 3, 0))


if __name__ == "__main__":
    C, H, W = 4, 16, 16
    k = KS

    key = jax.random.PRNGKey(0)
    kx, kw11, kb11 = jax.random.split(key, 3)

    # Module input: (c, h, w, 2)
    x = jax.random.normal(kx, (C, H, W, 2), dtype=jnp.float32)

    # Parameters, deterministically initialized (matching __init__ shapes).
    weight1 = jnp.ones((1, 1, k * k, H, W), dtype=jnp.float32) / float(k * k)
    # nn.Conv2d(c, c, 1): weight (c, c, 1, 1), bias (c,)
    bound = 1.0 / np.sqrt(C * 1 * 1)
    conv_w = jax.random.uniform(kw11, (C, C, 1, 1), jnp.float32, -bound, bound)
    conv_b = jax.random.uniform(kb11, (C,), jnp.float32, -bound, bound)
    # NOTE: self.mean_filter buffer is unused in forward() -> not needed here.

    out = self_similar_forward(x, weight1, conv_w, conv_b)
    out = jax.block_until_ready(out)

    ref = _reference_forward(x, weight1, conv_w, conv_b)
    assert out.shape == (C, H, W, 2)
    np.testing.assert_allclose(np.asarray(out), np.asarray(ref),
                               rtol=1e-5, atol=1e-5)

    print("KERNEL_OK")
</pallas_src>

<mosaic_0001>
module attributes {stable_mosaic.version = 11 : i64} {
  func.func @kernel(%arg0: i32, %arg1: memref<9x8x128xf32, #tpu.memory_space<vmem>>, %arg2: memref<9x1x128xf32, #tpu.memory_space<vmem>>, %arg3: memref<8x8xf32, #tpu.memory_space<vmem>>, %arg4: memref<8x1xf32, #tpu.memory_space<vmem>>, %arg5: memref<8x128xf32, #tpu.memory_space<vmem>>) attributes {dimension_semantics = [#tpu.dimension_semantics<parallel>], iteration_bounds = array<i64: 2>, scalar_prefetch = 0 : i64, scratch_operands = 0 : i64, tpu.core_type = #tpu.core_type<tc>, window_params = [{transform_indices = @transform_0, window_bounds = array<i64: 9, 8, 128>}, {transform_indices = @transform_1, window_bounds = array<i64: 9, 1, 128>}, {pipeline_mode = #tpu.pipeline_mode<synchronous>, transform_indices = @transform_2, window_bounds = array<i64: 8, 8>}, {pipeline_mode = #tpu.pipeline_mode<synchronous>, transform_indices = @transform_3, window_bounds = array<i64: 8, 1>}, {transform_indices = @transform_4, window_bounds = array<i64: 8, 128>}]} {
    %c0 = arith.constant 0 : index
    %c0_0 = arith.constant 0 : index
    %c0_1 = arith.constant 0 : index
    %0 = vector.load %arg1[%c0, %c0_0, %c0_1] : memref<9x8x128xf32, #tpu.memory_space<vmem>>, vector<1x8x128xf32>
    %1 = vector.shape_cast %0 : vector<1x8x128xf32> to vector<8x128xf32>
    %c0_2 = arith.constant 0 : index
    %c0_3 = arith.constant 0 : index
    %c0_4 = arith.constant 0 : index
    %2 = vector.load %arg2[%c0_2, %c0_3, %c0_4] : memref<9x1x128xf32, #tpu.memory_space<vmem>>, vector<1x1x128xf32>
    %3 = vector.shape_cast %2 : vector<1x1x128xf32> to vector<1x128xf32>
    %4 = vector.broadcast %3 : vector<1x128xf32> to vector<8x128xf32>
    %5 = arith.mulf %1, %4 : vector<8x128xf32>
    %c1 = arith.constant 1 : index
    %c0_5 = arith.constant 0 : index
    %c0_6 = arith.constant 0 : index
    %6 = vector.load %arg1[%c1, %c0_5, %c0_6] : memref<9x8x128xf32, #tpu.memory_space<vmem>>, vector<1x8x128xf32>
    %7 = vector.shape_cast %6 : vector<1x8x128xf32> to vector<8x128xf32>
    %c1_7 = arith.constant 1 : index
    %c0_8 = arith.constant 0 : index
    %c0_9 = arith.constant 0 : index
    %8 = vector.load %arg2[%c1_7, %c0_8, %c0_9] : memref<9x1x128xf32, #tpu.memory_space<vmem>>, vector<1x1x128xf32>
    %9 = vector.shape_cast %8 : vector<1x1x128xf32> to vector<1x128xf32>
    %10 = vector.broadcast %9 : vector<1x128xf32> to vector<8x128xf32>
    %11 = arith.mulf %7, %10 : vector<8x128xf32>
    %12 = arith.addf %5, %11 : vector<8x128xf32>
    %c2 = arith.constant 2 : index
    %c0_10 = arith.constant 0 : index
    %c0_11 = arith.constant 0 : index
    %13 = vector.load %arg1[%c2, %c0_10, %c0_11] : memref<9x8x128xf32, #tpu.memory_space<vmem>>, vector<1x8x128xf32>
    %14 = vector.shape_cast %13 : vector<1x8x128xf32> to vector<8x128xf32>
    %c2_12 = arith.constant 2 : index
    %c0_13 = arith.constant 0 : index
    %c0_14 = arith.constant 0 : index
    %15 = vector.load %arg2[%c2_12, %c0_13, %c0_14] : memref<9x1x128xf32, #tpu.memory_space<vmem>>, vector<1x1x128xf32>
    %16 = vector.shape_cast %15 : vector<1x1x128xf32> to vector<1x128xf32>
    %17 = vector.broadcast %16 : vector<1x128xf32> to vector<8x128xf32>
    %18 = arith.mulf %14, %17 : vector<8x128xf32>
    %19 = arith.addf %12, %18 : vector<8x128xf32>
    %c3 = arith.constant 3 : index
    %c0_15 = arith.constant 0 : index
    %c0_16 = arith.constant 0 : index
    %20 = vector.load %arg1[%c3, %c0_15, %c0_16] : memref<9x8x128xf32, #tpu.memory_space<vmem>>, vector<1x8x128xf32>
    %21 = vector.shape_cast %20 : vector<1x8x128xf32> to vector<8x128xf32>
    %c3_17 = arith.constant 3 : index
    %c0_18 = arith.constant 0 : index
    %c0_19 = arith.constant 0 : index
    %22 = vector.load %arg2[%c3_17, %c0_18, %c0_19] : memref<9x1x128xf32, #tpu.memory_space<vmem>>, vector<1x1x128xf32>
    %23 = vector.shape_cast %22 : vector<1x1x128xf32> to vector<1x128xf32>
    %24 = vector.broadcast %23 : vector<1x128xf32> to vector<8x128xf32>
    %25 = arith.mulf %21, %24 : vector<8x128xf32>
    %26 = arith.addf %19, %25 : vector<8x128xf32>
    %c4 = arith.constant 4 : index
    %c0_20 = arith.constant 0 : index
    %c0_21 = arith.constant 0 : index
    %27 = vector.load %arg1[%c4, %c0_20, %c0_21] : memref<9x8x128xf32, #tpu.memory_space<vmem>>, vector<1x8x128xf32>
    %28 = vector.shape_cast %27 : vector<1x8x128xf32> to vector<8x128xf32>
    %c4_22 = arith.constant 4 : index
    %c0_23 = arith.constant 0 : index
    %c0_24 = arith.constant 0 : index
    %29 = vector.load %arg2[%c4_22, %c0_23, %c0_24] : memref<9x1x128xf32, #tpu.memory_space<vmem>>, vector<1x1x128xf32>
    %30 = vector.shape_cast %29 : vector<1x1x128xf32> to vector<1x128xf32>
    %31 = vector.broadcast %30 : vector<1x128xf32> to vector<8x128xf32>
    %32 = arith.mulf %28, %31 : vector<8x128xf32>
    %33 = arith.addf %26, %32 : vector<8x128xf32>
    %c5 = arith.constant 5 : index
    %c0_25 = arith.constant 0 : index
    %c0_26 = arith.constant 0 : index
    %34 = vector.load %arg1[%c5, %c0_25, %c0_26] : memref<9x8x128xf32, #tpu.memory_space<vmem>>, vector<1x8x128xf32>
    %35 = vector.shape_cast %34 : vector<1x8x128xf32> to vector<8x128xf32>
    %c5_27 = arith.constant 5 : index
    %c0_28 = arith.constant 0 : index
    %c0_29 = arith.constant 0 : index
    %36 = vector.load %arg2[%c5_27, %c0_28, %c0_29] : memref<9x1x128xf32, #tpu.memory_space<vmem>>, vector<1x1x128xf32>
    %37 = vector.shape_cast %36 : vector<1x1x128xf32> to vector<1x128xf32>
    %38 = vector.broadcast %37 : vector<1x128xf32> to vector<8x128xf32>
    %39 = arith.mulf %35, %38 : vector<8x128xf32>
    %40 = arith.addf %33, %39 : vector<8x128xf32>
    %c6 = arith.constant 6 : index
    %c0_30 = arith.constant 0 : index
    %c0_31 = arith.constant 0 : index
    %41 = vector.load %arg1[%c6, %c0_30, %c0_31] : memref<9x8x128xf32, #tpu.memory_space<vmem>>, vector<1x8x128xf32>
    %42 = vector.shape_cast %41 : vector<1x8x128xf32> to vector<8x128xf32>
    %c6_32 = arith.constant 6 : index
    %c0_33 = arith.constant 0 : index
    %c0_34 = arith.constant 0 : index
    %43 = vector.load %arg2[%c6_32, %c0_33, %c0_34] : memref<9x1x128xf32, #tpu.memory_space<vmem>>, vector<1x1x128xf32>
    %44 = vector.shape_cast %43 : vector<1x1x128xf32> to vector<1x128xf32>
    %45 = vector.broadcast %44 : vector<1x128xf32> to vector<8x128xf32>
    %46 = arith.mulf %42, %45 : vector<8x128xf32>
    %47 = arith.addf %40, %46 : vector<8x128xf32>
    %c7 = arith.constant 7 : index
    %c0_35 = arith.constant 0 : index
    %c0_36 = arith.constant 0 : index
    %48 = vector.load %arg1[%c7, %c0_35, %c0_36] : memref<9x8x128xf32, #tpu.memory_space<vmem>>, vector<1x8x128xf32>
    %49 = vector.shape_cast %48 : vector<1x8x128xf32> to vector<8x128xf32>
    %c7_37 = arith.constant 7 : index
    %c0_38 = arith.constant 0 : index
    %c0_39 = arith.constant 0 : index
    %50 = vector.load %arg2[%c7_37, %c0_38, %c0_39] : memref<9x1x128xf32, #tpu.memory_space<vmem>>, vector<1x1x128xf32>
    %51 = vector.shape_cast %50 : vector<1x1x128xf32> to vector<1x128xf32>
    %52 = vector.broadcast %51 : vector<1x128xf32> to vector<8x128xf32>
    %53 = arith.mulf %49, %52 : vector<8x128xf32>
    %54 = arith.addf %47, %53 : vector<8x128xf32>
    %c8 = arith.constant 8 : index
    %c0_40 = arith.constant 0 : index
    %c0_41 = arith.constant 0 : index
    %55 = vector.load %arg1[%c8, %c0_40, %c0_41] : memref<9x8x128xf32, #tpu.memory_space<vmem>>, vector<1x8x128xf32>
    %56 = vector.shape_cast %55 : vector<1x8x128xf32> to vector<8x128xf32>
    %c8_42 = arith.constant 8 : index
    %c0_43 = arith.constant 0 : index
    %c0_44 = arith.constant 0 : index
    %57 = vector.load %arg2[%c8_42, %c0_43, %c0_44] : memref<9x1x128xf32, #tpu.memory_space<vmem>>, vector<1x1x128xf32>
    %58 = vector.shape_cast %57 : vector<1x1x128xf32> to vector<1x128xf32>
    %59 = vector.broadcast %58 : vector<1x128xf32> to vector<8x128xf32>
    %60 = arith.mulf %56, %59 : vector<8x128xf32>
    %61 = arith.addf %54, %60 : vector<8x128xf32>
    %c0_45 = arith.constant 0 : index
    %c0_46 = arith.constant 0 : index
    %62 = vector.load %arg3[%c0_45, %c0_46] : memref<8x8xf32, #tpu.memory_space<vmem>>, vector<8x8xf32>
    %c0_47 = arith.constant 0 : index
    %c0_48 = arith.constant 0 : index
    %63 = vector.load %arg4[%c0_47, %c0_48] : memref<8x1xf32, #tpu.memory_space<vmem>>, vector<8x1xf32>
    %64 = vector.extract_strided_slice %62 {offsets = [0, 0], sizes = [8, 1], strides = [1, 1]} : vector<8x8xf32> to vector<8x1xf32>
    %65 = vector.extract_strided_slice %61 {offsets = [0, 0], sizes = [1, 128], strides = [1, 1]} : vector<8x128xf32> to vector<1x128xf32>
    %66 = vector.broadcast %64 : vector<8x1xf32> to vector<8x128xf32>
    %67 = vector.broadcast %65 : vector<1x128xf32> to vector<8x128xf32>
    %68 = arith.mulf %66, %67 : vector<8x128xf32>
    %69 = vector.extract_strided_slice %62 {offsets = [0, 1], sizes = [8, 1], strides = [1, 1]} : vector<8x8xf32> to vector<8x1xf32>
    %70 = vector.extract_strided_slice %61 {offsets = [1, 0], sizes = [1, 128], strides = [1, 1]} : vector<8x128xf32> to vector<1x128xf32>
    %71 = vector.broadcast %69 : vector<8x1xf32> to vector<8x128xf32>
    %72 = vector.broadcast %70 : vector<1x128xf32> to vector<8x128xf32>
    %73 = arith.mulf %71, %72 : vector<8x128xf32>
    %74 = arith.addf %68, %73 : vector<8x128xf32>
    %75 = vector.extract_strided_slice %62 {offsets = [0, 2], sizes = [8, 1], strides = [1, 1]} : vector<8x8xf32> to vector<8x1xf32>
    %76 = vector.extract_strided_slice %61 {offsets = [2, 0], sizes = [1, 128], strides = [1, 1]} : vector<8x128xf32> to vector<1x128xf32>
    %77 = vector.broadcast %75 : vector<8x1xf32> to vector<8x128xf32>
    %78 = vector.broadcast %76 : vector<1x128xf32> to vector<8x128xf32>
    %79 = arith.mulf %77, %78 : vector<8x128xf32>
    %80 = arith.addf %74, %79 : vector<8x128xf32>
    %81 = vector.extract_strided_slice %62 {offsets = [0, 3], sizes = [8, 1], strides = [1, 1]} : vector<8x8xf32> to vector<8x1xf32>
    %82 = vector.extract_strided_slice %61 {offsets = [3, 0], sizes = [1, 128], strides = [1, 1]} : vector<8x128xf32> to vector<1x128xf32>
    %83 = vector.broadcast %81 : vector<8x1xf32> to vector<8x128xf32>
    %84 = vector.broadcast %82 : vector<1x128xf32> to vector<8x128xf32>
    %85 = arith.mulf %83, %84 : vector<8x128xf32>
    %86 = arith.addf %80, %85 : vector<8x128xf32>
    %87 = vector.extract_strided_slice %62 {offsets = [0, 4], sizes = [8, 1], strides = [1, 1]} : vector<8x8xf32> to vector<8x1xf32>
    %88 = vector.extract_strided_slice %61 {offsets = [4, 0], sizes = [1, 128], strides = [1, 1]} : vector<8x128xf32> to vector<1x128xf32>
    %89 = vector.broadcast %87 : vector<8x1xf32> to vector<8x128xf32>
    %90 = vector.broadcast %88 : vector<1x128xf32> to vector<8x128xf32>
    %91 = arith.mulf %89, %90 : vector<8x128xf32>
    %92 = arith.addf %86, %91 : vector<8x128xf32>
    %93 = vector.extract_strided_slice %62 {offsets = [0, 5], sizes = [8, 1], strides = [1, 1]} : vector<8x8xf32> to vector<8x1xf32>
    %94 = vector.extract_strided_slice %61 {offsets = [5, 0], sizes = [1, 128], strides = [1, 1]} : vector<8x128xf32> to vector<1x128xf32>
    %95 = vector.broadcast %93 : vector<8x1xf32> to vector<8x128xf32>
    %96 = vector.broadcast %94 : vector<1x128xf32> to vector<8x128xf32>
    %97 = arith.mulf %95, %96 : vector<8x128xf32>
    %98 = arith.addf %92, %97 : vector<8x128xf32>
    %99 = vector.extract_strided_slice %62 {offsets = [0, 6], sizes = [8, 1], strides = [1, 1]} : vector<8x8xf32> to vector<8x1xf32>
    %100 = vector.extract_strided_slice %61 {offsets = [6, 0], sizes = [1, 128], strides = [1, 1]} : vector<8x128xf32> to vector<1x128xf32>
    %101 = vector.broadcast %99 : vector<8x1xf32> to vector<8x128xf32>
    %102 = vector.broadcast %100 : vector<1x128xf32> to vector<8x128xf32>
    %103 = arith.mulf %101, %102 : vector<8x128xf32>
    %104 = arith.addf %98, %103 : vector<8x128xf32>
    %105 = vector.extract_strided_slice %62 {offsets = [0, 7], sizes = [8, 1], strides = [1, 1]} : vector<8x8xf32> to vector<8x1xf32>
    %106 = vector.extract_strided_slice %61 {offsets = [7, 0], sizes = [1, 128], strides = [1, 1]} : vector<8x128xf32> to vector<1x128xf32>
    %107 = vector.broadcast %105 : vector<8x1xf32> to vector<8x128xf32>
    %108 = vector.broadcast %106 : vector<1x128xf32> to vector<8x128xf32>
    %109 = arith.mulf %107, %108 : vector<8x128xf32>
    %110 = arith.addf %104, %109 : vector<8x128xf32>
    %111 = vector.broadcast %63 : vector<8x1xf32> to vector<8x128xf32>
    %112 = arith.addf %110, %111 : vector<8x128xf32>
    %c0_49 = arith.constant 0 : index
    %c0_50 = arith.constant 0 : index
    %113 = vector.load %arg5[%c0_49, %c0_50] : memref<8x128xf32, #tpu.memory_space<vmem>>, vector<8x128xf32>
    tpu.vector_store %arg5[%c0_49, %c0_50], %112 {strides = array<i32>} : memref<8x128xf32, #tpu.memory_space<vmem>>, vector<8x128xf32>,
    return
  }
  func.func @transform_0(%arg0: i32) -> (i32, i32, i32) {
    %c0_i32 = arith.constant 0 : i32
    %c0_i32_0 = arith.constant 0 : i32
    %c0_i32_1 = arith.constant 0 : i32
    return %c0_i32, %c0_i32_0, %arg0 : i32, i32, i32
  }
  func.func @transform_1(%arg0: i32) -> (i32, i32, i32) {
    %c0_i32 = arith.constant 0 : i32
    %c0_i32_0 = arith.constant 0 : i32
    %c0_i32_1 = arith.constant 0 : i32
    return %c0_i32, %c0_i32_0, %arg0 : i32, i32, i32
  }
  func.func @transform_2(%arg0: i32) -> (i32, i32) {
    %c0_i32 = arith.constant 0 : i32
    %c0_i32_0 = arith.constant 0 : i32
    %c0_i32_1 = arith.constant 0 : i32
    return %c0_i32, %c0_i32_0 : i32, i32
  }
  func.func @transform_3(%arg0: i32) -> (i32, i32) {
    %c0_i32 = arith.constant 0 : i32
    %c0_i32_0 = arith.constant 0 : i32
    %c0_i32_1 = arith.constant 0 : i32
    return %c0_i32, %c0_i32_0 : i32, i32
  }
  func.func @transform_4(%arg0: i32) -> (i32, i32) {
    %c0_i32 = arith.constant 0 : i32
    %c0_i32_0 = arith.constant 0 : i32
    return %c0_i32, %arg0 : i32, i32
  }
}

</mosaic_0001>

<llo_original>
// kernel: tpu_custom_call.1
$region0: #{tpu_custom_call.1}
  #allocation0 [shape = 'u32[]', space=smem, size = 0x4, offset = 0x4, fixed_abs, tag = 'smem constant byte address 0x4 - core index']
  #allocation1 [shape = 'u32[144,128]{1,0:T(1,128)}', space=vmem, size = 0x12000, scoped, tag = 'internal scratch']
  %s0 = inlined_call_operand.hbm [shape: f32[9,8,256], index: 0, kind: input, shape index: {}]
  %s1 = inlined_call_operand.hbm [shape: f32[9,1,256], index: 1, kind: input, shape index: {}]
  %s2 = inlined_call_operand.vmem [shape: f32[8,8], index: 2, kind: input, shape index: {}]
  %s3 = inlined_call_operand.vmem [shape: f32[8,1], index: 3, kind: input, shape index: {}]
  %s4 = inlined_call_operand.hbm [shape: f32[8,256], index: 4, kind: output, shape index: {}]
  %s5 = sld [smem:[#allocation0]]
  $region57: #{tpu_custom_call.1} parent=0
    _
  %s7 = ssub.s32 1, %s5
  %s8 = scalar_select 0, %s7, %s5
  $region1: #{tpu_custom_call.1} parent=0
    #allocation2 [shape = 'u8[73728]{0}', space=vmem, size = 0x12000, scoped, tag = 'input window, operand 0']
    #allocation3 [shape = 's32[2]{0}', space=sflag, size = 0x8, scoped, tag = 'scoped memory for tpu_custom_call.1']
    #allocation4 [shape = 's32[2]{0}', space=sflag, size = 0x8, scoped, tag = 'scoped memory for tpu_custom_call.1']
    #allocation5 [shape = 'u8[9216]{0}', space=vmem, size = 0x2400, scoped, tag = 'input window, operand 1']
    #allocation6 [shape = 's32[2]{0}', space=sflag, size = 0x8, scoped, tag = 'scoped memory for tpu_custom_call.1']
    #allocation7 [shape = 'u8[8192]{0}', space=vmem, size = 0x2000, scoped, tag = 'output window, operand 0']
    %9 = vsyncpa [#allocation3], 0
    %s10 = scalar_lea.sflag [#allocation3], 1
    %11 = vsyncpa %s10, 0
    %12 = vsyncpa [#allocation6], 0
    %s13 = scalar_lea.sflag [#allocation6], 1
    %14 = vsyncpa %s13, 0
    %15 = vsyncpa [#allocation4], 0
    %s16 = scalar_lea.sflag [#allocation4], 1
    %17 = vsyncpa %s16, 0
    loop: start=0, step=1, limit=4
    $region2: #{tpu_custom_call.1} parent=1 // loop_pre_header
      _
    $region3: #{tpu_custom_call.1} parent=1 // loop_header
      %s19 = sphi 0, %s23
      %p20 = scmp.ge.s32.totalorder %s19, 4
      %s29 = sphi 0, %s31
      %s32 = sphi 0, %s29
      %s33 = sphi 0, %s32
      %s49 = sphi 0, %s33
      %s55 = sphi 0, %s57
      %s58 = sphi 0, %s55
      %s59 = sphi 0, %s58
      %s75 = sphi 0, %s59
      %s79 = sphi 0, %s79
      %s81 = sphi 0, %s79
      %s82 = sphi 0, %s81
      %s96 = sphi 0, %s82
      %s100 = sphi 0, %s100
      %s102 = sphi 0, %s100
      %s103 = sphi 0, %s102
      %s117 = sphi 0, %s103
      %s123 = sphi 0, %s125
      %s126 = sphi 0, %s123
      %s127 = sphi 0, %s126
      %s143 = sphi 0, %s127
    $region4: #{tpu_custom_call.1} parent=1 // loop_header_branch
      %22 = sbr.rel (%p20) target = $region8
    $region5: #{tpu_custom_call.1} parent=1 // loop_body
      %s24 = ssub.s32 %s19, 1
      %s25 = ssub.s32 %s19, 2
      %s26 = sadd.s32 %s19, 1
      %s27 = ssub.s32 %s19, %s26
      %p28 = scmp.eq.s32.totalorder %s27, 0
      %s30 = sadd.s32 %s29, 1
      %s31 = scalar_select %p28, %s29, %s30
      %p34 = pneg %p28
      %p35 = scmp.eq.s32.totalorder %s19, 1
      %p36 = por %p34, %p35
      %p37 = scmp.ne.s32.totalorder %s29, %s32
      %p38 = scmp.eq.s32.totalorder %s19, 0
      %p39 = por %p37, %p38
      %p40 = scmp.ne.s32.totalorder %s29, %s32
      %p41 = scmp.eq.s32.totalorder %s24, 1
      %p42 = por %p40, %p41
      %p43 = scmp.ne.s32.totalorder %s32, %s33
      %p44 = scmp.eq.s32.totalorder %s24, 0
      %p45 = por %p43, %p44
      %p46 = scmp.ne.s32.totalorder %s32, %s33
      %p47 = scmp.eq.s32.totalorder %s25, 1
      %p48 = por %p46, %p47
      %p50 = scmp.ne.s32.totalorder %s33, %s49
      %p51 = scmp.eq.s32.totalorder %s25, 0
      %p52 = por %p50, %p51
      %s53 = ssub.s32 %s19, %s26
      %p54 = scmp.eq.s32.totalorder %s53, 0
      %s56 = sadd.s32 %s55, 1
      %s57 = scalar_select %p54, %s55, %s56
      %p60 = pneg %p54
      %p61 = scmp.eq.s32.totalorder %s19, 1
      %p62 = por %p60, %p61
      %p63 = scmp.ne.s32.totalorder %s55, %s58
      %p64 = scmp.eq.s32.totalorder %s19, 0
      %p65 = por %p63, %p64
      %p66 = scmp.ne.s32.totalorder %s55, %s58
      %p67 = scmp.eq.s32.totalorder %s24, 1
      %p68 = por %p66, %p67
      %p69 = scmp.ne.s32.totalorder %s58, %s59
      %p70 = scmp.eq.s32.totalorder %s24, 0
      %p71 = por %p69, %p70
      %p72 = scmp.ne.s32.totalorder %s58, %s59
      %p73 = scmp.eq.s32.totalorder %s25, 1
      %p74 = por %p72, %p73
      %p76 = scmp.ne.s32.totalorder %s59, %s75
      %p77 = scmp.eq.s32.totalorder %s25, 0
      %p78 = por %p76, %p77
      %s80 = sadd.s32 %s79, 1
      %p83 = scmp.eq.s32.totalorder %s19, 1
      %p84 = scmp.ne.s32.totalorder %s79, %s81
      %p85 = scmp.eq.s32.totalorder %s19, 0
      %p86 = por %p84, %p85
      %p87 = scmp.ne.s32.totalorder %s79, %s81
      %p88 = scmp.eq.s32.totalorder %s24, 1
      %p89 = por %p87, %p88
      %p90 = scmp.ne.s32.totalorder %s81, %s82
      %p91 = scmp.eq.s32.totalorder %s24, 0
      %p92 = por %p90, %p91
      %p93 = scmp.ne.s32.totalorder %s81, %s82
      %p94 = scmp.eq.s32.totalorder %s25, 1
      %p95 = por %p93, %p94
      %p97 = scmp.ne.s32.totalorder %s82, %s96
      %p98 = scmp.eq.s32.totalorder %s25, 0
      %p99 = por %p97, %p98
      %s101 = sadd.s32 %s100, 1
      %p104 = scmp.eq.s32.totalorder %s19, 1
      %p105 = scmp.ne.s32.totalorder %s100, %s102
      %p106 = scmp.eq.s32.totalorder %s19, 0
      %p107 = por %p105, %p106
      %p108 = scmp.ne.s32.totalorder %s100, %s102
      %p109 = scmp.eq.s32.totalorder %s24, 1
      %p110 = por %p108, %p109
      %p111 = scmp.ne.s32.totalorder %s102, %s103
      %p112 = scmp.eq.s32.totalorder %s24, 0
      %p113 = por %p111, %p112
      %p114 = scmp.ne.s32.totalorder %s102, %s103
      %p115 = scmp.eq.s32.totalorder %s25, 1
      %p116 = por %p114, %p115
      %p118 = scmp.ne.s32.totalorder %s103, %s117
      %p119 = scmp.eq.s32.totalorder %s25, 0
      %p120 = por %p118, %p119
      %s121 = ssub.s32 %s19, %s26
      %p122 = scmp.eq.s32.totalorder %s121, 0
      %s124 = sadd.s32 %s123, 1
      %s125 = scalar_select %p122, %s123, %s124
      %p128 = pneg %p122
      %p129 = scmp.eq.s32.totalorder %s19, 1
      %p130 = por %p128, %p129
      %p131 = scmp.ne.s32.totalorder %s123, %s126
      %p132 = scmp.eq.s32.totalorder %s19, 0
      %p133 = por %p131, %p132
      %p134 = scmp.ne.s32.totalorder %s123, %s126
      %p135 = scmp.eq.s32.totalorder %s24, 1
      %p136 = por %p134, %p135
      %p137 = scmp.ne.s32.totalorder %s126, %s127
      %p138 = scmp.eq.s32.totalorder %s24, 0
      %p139 = por %p137, %p138
      %p140 = scmp.ne.s32.totalorder %s126, %s127
      %p141 = scmp.eq.s32.totalorder %s25, 1
      %p142 = por %p140, %p141
      %p144 = scmp.ne.s32.totalorder %s127, %s143
      %p145 = scmp.eq.s32.totalorder %s25, 0
      %p146 = por %p144, %p145
      %p147 = scmp.le.s32.totalorder 1, %s19
      %p148 = scmp.lt.s32.totalorder %s19, 3
      %p149 = pnand %p147, %p148
      %p150 = pneg %p149
      // Predicated region
      $region9: #{tpu_custom_call.1} parent=5 // pred_check
        _
      $region10: #{tpu_custom_call.1} parent=5 // pred_check_branch
        %152 = sbr.rel (%p149) target = $region12
      $region11: #{tpu_custom_call.1} parent=5 // pred_region
        %s153 = ssub.s32 %s19, 1
        // Predicated region
        $region13: #{tpu_custom_call.1} parent=11 // pred_check
          %p154 = pneg %p92
        $region14: #{tpu_custom_call.1} parent=11 // pred_check_branch
          %156 = sbr.rel (%p154) target = $region16
        $region15: #{tpu_custom_call.1} parent=11 // pred_region
          _
        $region16: #{tpu_custom_call.1} parent=11 // pred_fallthru
          _
        // Predicated region
        $region17: #{tpu_custom_call.1} parent=11 // pred_check
          %p157 = pneg %p113
        $region18: #{tpu_custom_call.1} parent=11 // pred_check_branch
          %159 = sbr.rel (%p157) target = $region20
        $region19: #{tpu_custom_call.1} parent=11 // pred_region
          _
        $region20: #{tpu_custom_call.1} parent=11 // pred_fallthru
          _
      $region12: #{tpu_custom_call.1} parent=5 // pred_fallthru
        _
      %p160 = scmp.lt.s32.totalorder %s19, 2
      // Predicated region
      $region21: #{tpu_custom_call.1} parent=5 // pred_check
        %p161 = pneg %p160
      $region22: #{tpu_custom_call.1} parent=5 // pred_check_branch
        %163 = sbr.rel (%p161) target = $region24
      $region23: #{tpu_custom_call.1} parent=5 // pred_region
        // Predicated region
        $region25: #{tpu_custom_call.1} parent=23 // pred_check
          %p164 = pneg %p39
        $region26: #{tpu_custom_call.1} parent=23 // pred_check_branch
          %166 = sbr.rel (%p164) target = $region28
        $region27: #{tpu_custom_call.1} parent=23 // pred_region
          %s167 = sand.u32 %s29, 1
          %s168 = scalar_lea.sflag [#allocation3], %s167
          %s169 = sand.u32 %s29, 1
          %s170 = smul.addr %s169, 72
          %s171 = scalar_lea.vmem [#allocation2], %s170
          %s173 = ssub.s32 1152, 1152
          %174 = vsyncadd %s168, %s173
          %s175 = smul.addr %s19, 128
          %s176 = scalar_lea.hbm %s0, %s175
          %s177 = sshll.u32 %s171, 4
          %s178 = int_to_ptr.vmem [resolvable:$true] %s177
          %183 = dma.hbm_to_vmem [thread:$0]  %s176, 1152, %s178, %s168, 256, 128, 8
        $region28: #{tpu_custom_call.1} parent=23 // pred_fallthru
          _
        // Predicated region
        $region29: #{tpu_custom_call.1} parent=23 // pred_check
          %p184 = pneg %p65
        $region30: #{tpu_custom_call.1} parent=23 // pred_check_branch
          %186 = sbr.rel (%p184) target = $region32
        $region31: #{tpu_custom_call.1} parent=23 // pred_region
          %s187 = sand.u32 %s55, 1
          %s188 = scalar_lea.sflag [#allocation6], %s187
          %s189 = sand.u32 %s55, 1
          %s190 = smul.addr %s189, 9
          %s191 = scalar_lea.vmem [#allocation5], %s190
          %s193 = ssub.s32 144, 144
          %194 = vsyncadd %s188, %s193
          %s195 = smul.addr %s19, 16
          %s196 = scalar_lea.hbm %s1, %s195
          %s197 = sshll.u32 %s191, 4
          %s198 = int_to_ptr.vmem [resolvable:$true] %s197
          %203 = dma.hbm_to_vmem [thread:$0]  %s196, 144, %s198, %s188, 32, 16, 1
        $region32: #{tpu_custom_call.1} parent=23 // pred_fallthru
          _
      $region24: #{tpu_custom_call.1} parent=5 // pred_fallthru
        _
      %p204 = scmp.le.s32.totalorder 1, %s19
      %p205 = scmp.lt.s32.totalorder %s19, 3
      %p206 = pnand %p204, %p205
      %p207 = pneg %p206
      // Predicated region
      $region33: #{tpu_custom_call.1} parent=5 // pred_check
        _
      $region34: #{tpu_custom_call.1} parent=5 // pred_check_branch
        %209 = sbr.rel (%p206) target = $region36
      $region35: #{tpu_custom_call.1} parent=5 // pred_region
        %s210 = ssub.s32 %s19, 1
        %s211 = sand.u32 %s32, 1
        %s212 = scalar_lea.sflag [#allocation3], %s211
        %s213 = sand.u32 %s32, 1
        %s214 = smul.addr %s213, 72
        %s215 = scalar_lea.vmem [#allocation2], %s214
        // Predicated region
        $region37: #{tpu_custom_call.1} parent=35 // pred_check
          %p216 = pneg %p45
        $region38: #{tpu_custom_call.1} parent=35 // pred_check_branch
          %218 = sbr.rel (%p216) target = $region40
        $region39: #{tpu_custom_call.1} parent=35 // pred_region
          %219 = dma.done %s212, 1152
        $region40: #{tpu_custom_call.1} parent=35 // pred_fallthru
          _
        %s220 = sand.u32 %s58, 1
        %s221 = scalar_lea.sflag [#allocation6], %s220
        %s222 = sand.u32 %s58, 1
        %s223 = smul.addr %s222, 9
        %s224 = scalar_lea.vmem [#allocation5], %s223
        // Predicated region
        $region41: #{tpu_custom_call.1} parent=35 // pred_check
          %p225 = pneg %p71
        $region42: #{tpu_custom_call.1} parent=35 // pred_check_branch
          %227 = sbr.rel (%p225) target = $region44
        $region43: #{tpu_custom_call.1} parent=35 // pred_region
          %228 = dma.done %s221, 144
        $region44: #{tpu_custom_call.1} parent=35 // pred_fallthru
          _
        %s229 = sand.u32 %s32, 1
        %s230 = scalar_lea.sflag [#allocation3], %s229
        %s231 = sand.u32 %s32, 1
        %s232 = smul.addr %s231, 72
        %s233 = scalar_lea.vmem [#allocation2], %s232
        %p234 = pneg %p45
        %p235 = pneg %p42
        %s236 = sand.u32 %s58, 1
        %s237 = scalar_lea.sflag [#allocation6], %s236
        %s238 = sand.u32 %s58, 1
        %s239 = smul.addr %s238, 9
        %s240 = scalar_lea.vmem [#allocation5], %s239
        %p241 = pneg %p71
        %p242 = pneg %p68
        %p243 = pneg %p92
        %p244 = pneg %p89
        %p245 = pneg %p113
        %p246 = pneg %p110
        %p247 = pneg %p139
        %p248 = pneg %p136
        %s249 = sand.u32 %s126, 1
        %s250 = scalar_lea.sflag [#allocation4], %s249
        %s251 = sand.u32 %s126, 1
        %s252 = smul.addr %s251, 8
        %s253 = scalar_lea.vmem [#allocation7], %s252
        %v254 = vld [vmem:[%s215] sm:$0xff]
        %v255 = vld [vmem:[%s224] sm:$0x1]
        %v257 = vlaneseq
        %v258 = vshrl.u32 %v257, 7
        %v259 = vsub.s32 0, %v258
        %v260 = vrot.slane %v255, %v259
        %v262 = vmul.f32 %v254, %v260
        %s263 = scalar_lea.vmem %s215, 8 [#allocation2]
        %v264 = vld [vmem:[%s263] sm:$0xff]
        %s265 = scalar_lea.vmem %s224, 1 [#allocation5]
        %v266 = vld [vmem:[%s265] sm:$0x1]
        %v268 = vlaneseq
        %v269 = vshrl.u32 %v268, 7
        %v270 = vsub.s32 0, %v269
        %v271 = vrot.slane %v266, %v270
        %v273 = vmul.f32 %v264, %v271
        %v274 = vadd.f32 %v262, %v273
        %s275 = scalar_lea.vmem %s215, 16 [#allocation2]
        %v276 = vld [vmem:[%s275] sm:$0xff]
        %s277 = scalar_lea.vmem %s224, 2 [#allocation5]
        %v278 = vld [vmem:[%s277] sm:$0x1]
        %v280 = vlaneseq
        %v281 = vshrl.u32 %v280, 7
        %v282 = vsub.s32 0, %v281
        %v283 = vrot.slane %v278, %v282
        %v285 = vmul.f32 %v276, %v283
        %v286 = vadd.f32 %v274, %v285
        %s287 = scalar_lea.vmem %s215, 24 [#allocation2]
        %v288 = vld [vmem:[%s287] sm:$0xff]
        %s289 = scalar_lea.vmem %s224, 3 [#allocation5]
        %v290 = vld [vmem:[%s289] sm:$0x1]
        %v292 = vlaneseq
        %v293 = vshrl.u32 %v292, 7
        %v294 = vsub.s32 0, %v293
        %v295 = vrot.slane %v290, %v294
        %v297 = vmul.f32 %v288, %v295
        %v298 = vadd.f32 %v286, %v297
        %s299 = scalar_lea.vmem %s215, 32 [#allocation2]
        %v300 = vld [vmem:[%s299] sm:$0xff]
        %s301 = scalar_lea.vmem %s224, 4 [#allocation5]
        %v302 = vld [vmem:[%s301] sm:$0x1]
        %v304 = vlaneseq
        %v305 = vshrl.u32 %v304, 7
        %v306 = vsub.s32 0, %v305
        %v307 = vrot.slane %v302, %v306
        %v309 = vmul.f32 %v300, %v307
        %v310 = vadd.f32 %v298, %v309
        %s311 = scalar_lea.vmem %s215, 40 [#allocation2]
        %v312 = vld [vmem:[%s311] sm:$0xff]
        %s313 = scalar_lea.vmem %s224, 5 [#allocation5]
        %v314 = vld [vmem:[%s313] sm:$0x1]
        %v316 = vlaneseq
        %v317 = vshrl.u32 %v316, 7
        %v318 = vsub.s32 0, %v317
        %v319 = vrot.slane %v314, %v318
        %v321 = vmul.f32 %v312, %v319
        %v322 = vadd.f32 %v310, %v321
        %s323 = scalar_lea.vmem %s215, 48 [#allocation2]
        %v324 = vld [vmem:[%s323] sm:$0xff]
        %s325 = scalar_lea.vmem %s224, 6 [#allocation5]
        %v326 = vld [vmem:[%s325] sm:$0x1]
        %v328 = vlaneseq
        %v329 = vshrl.u32 %v328, 7
        %v330 = vsub.s32 0, %v329
        %v331 = vrot.slane %v326, %v330
        %v333 = vmul.f32 %v324, %v331
        %v334 = vadd.f32 %v322, %v333
        %s335 = scalar_lea.vmem %s215, 56 [#allocation2]
        %v336 = vld [vmem:[%s335] sm:$0xff]
        %s337 = scalar_lea.vmem %s224, 7 [#allocation5]
        %v338 = vld [vmem:[%s337] sm:$0x1]
        %v340 = vlaneseq
        %v341 = vshrl.u32 %v340, 7
        %v342 = vsub.s32 0, %v341
        %v343 = vrot.slane %v338, %v342
        %v345 = vmul.f32 %v336, %v343
        %v346 = vadd.f32 %v334, %v345
        %s347 = scalar_lea.vmem %s215, 64 [#allocation2]
        %v348 = vld [vmem:[%s347] sm:$0xff]
        %s349 = scalar_lea.vmem %s224, 8 [#allocation5]
        %v350 = vld [vmem:[%s349] sm:$0x1]
        %v352 = vlaneseq
        %v353 = vshrl.u32 %v352, 7
        %v354 = vsub.s32 0, %v353
        %v355 = vrot.slane %v350, %v354
        %v357 = vmul.f32 %v348, %v355
        %v358 = vadd.f32 %v346, %v357
        %v359 = vld [vmem:[%s2] sm:$0xff]
        %v360 = vld [vmem:[%s3] sm:$0xff]
        %362 = vset.pattern.permute.xlu0 0
        %363 = vperm.xlu0 %362, %v359
        %v364 = vpop.permute.xlu0 %363
        %v366 = vlaneseq
        %v367 = vshrl.u32 %v366, 7
        %v368 = vsub.s32 0, %v367
        %v369 = vrot.slane %v358, %v368
        %v370 = vmul.f32 %v364, %v369
        %371 = vset.pattern.permute.xlu0 1
        %372 = vperm.xlu0 %371, %v359
        %v373 = vpop.permute.xlu0 %372
        %v375 = vlaneseq
        %v376 = vshrl.u32 %v375, 7
        %v377 = vsub.s32 1, %v376
        %v378 = vrot.slane %v358, %v377
        %v379 = vmul.f32 %v373, %v378
        %v380 = vadd.f32 %v370, %v379
        %381 = vset.pattern.permute.xlu0 2
        %382 = vperm.xlu0 %381, %v359
        %v383 = vpop.permute.xlu0 %382
        %v385 = vlaneseq
        %v386 = vshrl.u32 %v385, 7
        %v387 = vsub.s32 2, %v386
        %v388 = vrot.slane %v358, %v387
        %v389 = vmul.f32 %v383, %v388
        %v390 = vadd.f32 %v380, %v389
        %391 = vset.pattern.permute.xlu0 3
        %392 = vperm.xlu0 %391, %v359
        %v393 = vpop.permute.xlu0 %392
        %v395 = vlaneseq
        %v396 = vshrl.u32 %v395, 7
        %v397 = vsub.s32 3, %v396
        %v398 = vrot.slane %v358, %v397
        %v399 = vmul.f32 %v393, %v398
        %v400 = vadd.f32 %v390, %v399
        %401 = vset.pattern.permute.xlu0 4
        %402 = vperm.xlu0 %401, %v359
        %v403 = vpop.permute.xlu0 %402
        %v405 = vlaneseq
        %v406 = vshrl.u32 %v405, 7
        %v407 = vsub.s32 4, %v406
        %v408 = vrot.slane %v358, %v407
        %v409 = vmul.f32 %v403, %v408
        %v410 = vadd.f32 %v400, %v409
        %411 = vset.pattern.permute.xlu0 5
        %412 = vperm.xlu0 %411, %v359
        %v413 = vpop.permute.xlu0 %412
        %v415 = vlaneseq
        %v416 = vshrl.u32 %v415, 7
        %v417 = vsub.s32 5, %v416
        %v418 = vrot.slane %v358, %v417
        %v419 = vmul.f32 %v413, %v418
        %v420 = vadd.f32 %v410, %v419
        %421 = vset.pattern.permute.xlu0 6
        %422 = vperm.xlu0 %421, %v359
        %v423 = vpop.permute.xlu0 %422
        %v425 = vlaneseq
        %v426 = vshrl.u32 %v425, 7
        %v427 = vsub.s32 6, %v426
        %v428 = vrot.slane %v358, %v427
        %v429 = vmul.f32 %v423, %v428
        %v430 = vadd.f32 %v420, %v429
        %431 = vset.pattern.permute.xlu0 7
        %432 = vperm.xlu0 %431, %v359
        %v433 = vpop.permute.xlu0 %432
        %v435 = vlaneseq
        %v436 = vshrl.u32 %v435, 7
        %v437 = vsub.s32 7, %v436
        %v438 = vrot.slane %v358, %v437
        %v439 = vmul.f32 %v433, %v438
        %v440 = vadd.f32 %v430, %v439
        %442 = vset.pattern.permute.xlu0 0
        %443 = vperm.xlu0 %442, %v360
        %v444 = vpop.permute.xlu0 %443
        %v446 = vadd.f32 %v440, %v444
        %447 = vst [vmem:[%s253] sm:$0xff] %v446
        %s448 = sand.u32 %s126, 1
        %s449 = scalar_lea.sflag [#allocation4], %s448
        %s450 = sand.u32 %s126, 1
        %s451 = smul.addr %s450, 8
        %s452 = scalar_lea.vmem [#allocation7], %s451
        // Predicated region
        $region45: #{tpu_custom_call.1} parent=35 // pred_check
          %p453 = pneg %p136
        $region46: #{tpu_custom_call.1} parent=35 // pred_check_branch
          %455 = sbr.rel (%p453) target = $region48
        $region47: #{tpu_custom_call.1} parent=35 // pred_region
          %s457 = ssub.s32 128, 128
          %458 = vsyncadd %s449, %s457
          %s459 = smul.addr %s24, 128
          %s460 = scalar_lea.hbm %s4, %s459
          %s462 = sshll.u32 %s452, 4
          %s463 = int_to_ptr.vmem [resolvable:$true] %s462
          %465 = dma.vmem_to_hbm [thread:$0]  %s463, 128, %s460, %s449
        $region48: #{tpu_custom_call.1} parent=35 // pred_fallthru
          _
      $region36: #{tpu_custom_call.1} parent=5 // pred_fallthru
        _
      %p466 = scmp.le.s32.totalorder 2, %s19
      // Predicated region
      $region49: #{tpu_custom_call.1} parent=5 // pred_check
        %p467 = pneg %p466
      $region50: #{tpu_custom_call.1} parent=5 // pred_check_branch
        %469 = sbr.rel (%p467) target = $region52
      $region51: #{tpu_custom_call.1} parent=5 // pred_region
        %s470 = ssub.s32 %s19, 2
        // Predicated region
        $region53: #{tpu_custom_call.1} parent=51 // pred_check
          %p471 = pneg %p142
        $region54: #{tpu_custom_call.1} parent=51 // pred_check_branch
          %473 = sbr.rel (%p471) target = $region56
        $region55: #{tpu_custom_call.1} parent=51 // pred_region
          %s474 = sand.u32 %s127, 1
          %s475 = scalar_lea.sflag [#allocation4], %s474
          %s476 = sand.u32 %s127, 1
          %s477 = smul.addr %s476, 8
          %s478 = scalar_lea.vmem [#allocation7], %s477
          %479 = dma.done %s475, 128
        $region56: #{tpu_custom_call.1} parent=51 // pred_fallthru
          _
      $region52: #{tpu_custom_call.1} parent=5 // pred_fallthru
        _
    $region6: #{tpu_custom_call.1} parent=1 // loop_footer
      %s23 = sadd.s32 1, %s19
    $region7: #{tpu_custom_call.1} parent=1 // loop_footer_branch
      %18 = sbr.rel target = $region3
    $region8: #{tpu_custom_call.1} parent=1 // loop_exit
      _
    %480 = vsyncpa [#allocation3], 1
    %s481 = scalar_lea.sflag [#allocation3], 1
    %482 = vsyncpa %s481, 1
    %483 = vsyncpa [#allocation6], 1
    %s484 = scalar_lea.sflag [#allocation6], 1
    %485 = vsyncpa %s484, 1
    %486 = vsyncpa [#allocation4], 1
    %s487 = scalar_lea.sflag [#allocation4], 1
    %488 = vsyncpa %s487, 1

</llo_original>
